<compile_context>
chip_gen: v7x
topology: tpu7x:2x2x1
jax: 0.10.0
libtpu: 0.0.40
codegen_flags: <defaults>
</compile_context>

<pallas_src>
import functools

import jax
import jax.numpy as jnp
from jax import lax
from jax.experimental import pallas as pl
from jax.experimental.pallas import tpu as pltpu


def _round_up(x, m):
    return (x + m - 1) // m * m


def _choose_tile_m(n_tokens, target):
    """Pick a token-tile size.

    Preference order:
      * single full block when the problem is small,
      * split a moderately-sized single tile in two (keeps both v7x TCs busy),
      * largest divisor of N that is a multiple of 8 and <= target
        (=> no token padding, no post-kernel slice),
      * 0 => caller must pad the token axis (rare fallback).
    """
    if n_tokens <= target:
        if n_tokens >= 512 and n_tokens % 16 == 0:
            return n_tokens // 2          # 2 even tiles -> both TensorCores
        return n_tokens
    min_tile = max(8, target // 8)
    t = target - target % 8
    while t >= min_tile:
        if n_tokens % t == 0:
            return t
        t -= 8
    return 0


def _tagger_kernel(x_ref, w_ref, b_ref, lab_ref, *out_refs,
                   with_logits, matmul_dtype):
    """One grid step: linear classifier on tile_m tokens + masked-CE partials.

    x_ref   : (tile_m, E)  f32 activations (cast to bf16 in-kernel)
    w_ref   : (E, T)       bf16 classifier weight, pre-transposed (resident)
    b_ref   : (1, T)       f32 bias (resident)
    lab_ref : (tile_m, 1)  int32 labels (0 = ignore_index)
    out_refs: [logits_ref (tile_m, T)] , part_ref (1, 1, 128)
              part lane0 = sum(loss), lane1 = sum(valid)
    """
    if with_logits:
        logits_ref, part_ref = out_refs
    else:
        (part_ref,) = out_refs

    # Per-tile bf16 cast keeps the HBM activation stream at its native f32
    # (no wrapper pad/cast pass) while the MXU runs at bf16 throughput.
    x = x_ref[...].astype(matmul_dtype)
    logits = jnp.dot(x, w_ref[...], preferred_element_type=jnp.float32) + b_ref[...]

    if with_logits:
        logits_ref[...] = logits.astype(logits_ref.dtype)

    labels = lab_ref[...]                                     # (tile_m, 1)

    # Masked cross-entropy (ignore_index = 0); all math in f32.
    col = lax.broadcasted_iota(jnp.int32, logits.shape, 1)    # (tile_m, T)
    tgt_logit = jnp.sum(jnp.where(col == labels, logits, 0.0),
                        axis=-1, keepdims=True)               # fused one-hot gather
    m = jnp.max(logits, axis=-1, keepdims=True)
    lse = m + jnp.log(jnp.sum(jnp.exp(logits - m), axis=-1, keepdims=True))
    per_row = lse - tgt_logit                                  # (tile_m, 1)

    valid = (labels != 0).astype(jnp.float32)
    loss_tile = jnp.sum(per_row * valid)
    cnt_tile = jnp.sum(valid)

    lane = lax.broadcasted_iota(jnp.int32, part_ref.shape, 2)  # (1, 1, 128)
    part_ref[...] = jnp.where(lane == 0, loss_tile,
                              jnp.where(lane == 1, cnt_tile, 0.0))


def tagger_forward(encoder_reps, mask, labels, w_t, bias, *,
                   return_logits=True, target_tile_m=1024,
                   matmul_dtype=jnp.bfloat16, logits_dtype=jnp.float32):
    """Pallas Tagger forward.  `mask` unused (use_tagger_lstm=False branch)."""
    del mask
    B, S, E = encoder_reps.shape
    Ew, T = w_t.shape
    assert Ew == E
    N = B * S

    tile_m = _choose_tile_m(N, target_tile_m)
    if tile_m > 0:
        N_pad = N
    else:
        # Rare fallback: token count has no convenient divisor -> pad tokens.
        tile_m = min(target_tile_m, _round_up(N, 8))
        N_pad = _round_up(N, tile_m)
    num_tiles = N_pad // tile_m

    x = encoder_reps.reshape(N, E)                 # free reshape, dtype unchanged
    lab = labels.reshape(N).astype(jnp.int32)
    if N_pad != N:
        x = jnp.pad(x, ((0, N_pad - N), (0, 0)))
        lab = jnp.pad(lab, (0, N_pad - N))         # pad label 0 = ignore_index
    lab = lab.reshape(N_pad, 1)

    w = w_t.astype(matmul_dtype)                   # tiny (E, T): one-time cast
    b = bias.astype(jnp.float32).reshape(1, T)

    in_specs = [
        pl.BlockSpec((tile_m, E), lambda i: (i, 0)),   # activations (f32)
        pl.BlockSpec((E, T), lambda i: (0, 0)),        # W^T (resident)
        pl.BlockSpec((1, T), lambda i: (0, 0)),        # bias (resident)
        pl.BlockSpec((tile_m, 1), lambda i: (i, 0)),   # labels
    ]
    part_shape = jax.ShapeDtypeStruct((num_tiles, 1, 128), jnp.float32)
    part_spec = pl.BlockSpec((1, 1, 128), lambda i: (i, 0, 0))

    if return_logits:
        out_shape = (jax.ShapeDtypeStruct((N_pad, T), logits_dtype), part_shape)
        out_specs = [pl.BlockSpec((tile_m, T), lambda i: (i, 0)), part_spec]
        logit_bytes = N_pad * T * jnp.dtype(logits_dtype).itemsize
    else:
        out_shape = part_shape
        out_specs = part_spec
        logit_bytes = 0

    cost = pl.CostEstimate(
        flops=2 * N_pad * E * T,
        transcendentals=N_pad * T,                          # exp in logsumexp
        bytes_accessed=(N_pad * E * encoder_reps.dtype.itemsize
                        + E * T * jnp.dtype(matmul_dtype).itemsize
                        + T * 4 + N_pad * 4
                        + logit_bytes
                        + num_tiles * 128 * 4),
    )

    kernel = functools.partial(_tagger_kernel, with_logits=return_logits,
                               matmul_dtype=matmul_dtype)

    result = pl.pallas_call(
        kernel,
        out_shape=out_shape,
        grid_spec=pltpu.PrefetchScalarGridSpec(
            num_scalar_prefetch=0,
            grid=(num_tiles,),
            in_specs=in_specs,
            out_specs=out_specs,
        ),
        compiler_params=pltpu.CompilerParams(
            dimension_semantics=("parallel",)),             # token axis: parallel
        cost_estimate=cost,
    )(x, w, b, lab)

    if return_logits:
        logits_flat, partials = result
    else:
        partials = result

    # Matches PyTorch: NaN if every label is ignore_index (all-zero labels).
    loss = jnp.sum(partials[:, 0, 0]) / jnp.sum(partials[:, 0, 1])

    if not return_logits:
        return loss, None

    if N_pad != N:
        # TODO(synk): only hit in the rare no-divisor fallback; costs one slice pass.
        logits_flat = logits_flat[:N]
    logits = logits_flat.reshape(B, S, T)
    return loss, logits


def reference_forward(encoder_reps, labels, w_t, bias, matmul_dtype=jnp.float32):
    """Pure-JAX reference (optionally with the same bf16 matmul inputs)."""
    B, S, E = encoder_reps.shape
    T = w_t.shape[1]
    x = encoder_reps.reshape(-1, E).astype(matmul_dtype)
    w = w_t.astype(matmul_dtype)
    logits = jnp.dot(x, w, preferred_element_type=jnp.float32) + bias.astype(jnp.float32)
    labels_f = labels.reshape(-1)
    m = jnp.max(logits, axis=-1, keepdims=True)
    lse = (m + jnp.log(jnp.sum(jnp.exp(logits - m), axis=-1, keepdims=True)))[:, 0]
    tgt = jnp.take_along_axis(logits, labels_f[:, None], axis=-1)[:, 0]
    per_row = lse - tgt
    valid = (labels_f != 0).astype(jnp.float32)
    loss = jnp.sum(per_row * valid) / jnp.sum(valid)
    return loss, logits.reshape(B, S, T)


if __name__ == "__main__":
    def run_case(B, S, E, T, case_id):
        key = jax.random.fold_in(jax.random.PRNGKey(0), case_id)
        k_x, k_w, k_l = jax.random.split(key, 3)

        encoder_reps = jax.random.normal(k_x, (B, S, E), dtype=jnp.float32)
        attention_mask = jnp.ones((B, S), dtype=jnp.int32)

        # Xavier-uniform classifier weight (fan_in=E, fan_out=T), zero bias,
        # as done by Tagger._init_weights.  Passed pre-transposed: [E, T].
        limit = (6.0 / (E + T)) ** 0.5
        w_t = jax.random.uniform(k_w, (E, T), minval=-limit, maxval=limit,
                                 dtype=jnp.float32)
        bias = jnp.zeros((T,), dtype=jnp.float32)

        labels = jax.random.randint(k_l, (B, S), 0, T, dtype=jnp.int32)
        labels = labels.at[0, 0].set(1)  # guarantee at least one non-ignored token

        # Full forward (logits + loss).
        loss, logits = tagger_forward(encoder_reps, attention_mask, labels, w_t, bias)
        jax.block_until_ready((loss, logits))

        # Loss-only (training-step) mode.
        loss_only, _ = tagger_forward(encoder_reps, attention_mask, labels, w_t, bias,
                                      return_logits=False)
        jax.block_until_ready(loss_only)
        assert jnp.allclose(loss_only, loss, atol=1e-5, rtol=1e-5)

        # Tight check against a reference using the same bf16 matmul inputs.
        ref_loss_b, ref_logits_b = reference_forward(
            encoder_reps, labels, w_t, bias, matmul_dtype=jnp.bfloat16)
        assert jnp.allclose(logits, ref_logits_b, atol=1e-4, rtol=1e-4)
        assert jnp.allclose(loss, ref_loss_b, atol=1e-3, rtol=1e-3)

        # Sanity check against pure-f32 (PyTorch) semantics within the bf16 budget.
        ref_loss, ref_logits = reference_forward(encoder_reps, labels, w_t, bias)
        assert jnp.allclose(logits, ref_logits, atol=5e-2, rtol=5e-2)
        assert jnp.allclose(loss, ref_loss, atol=5e-2, rtol=5e-2)

    # Small shapes implied by the module: batch=2, seq=8, encoder_output_dim=32, n_tags=16
    run_case(2, 8, 32, 16, case_id=0)
    # Larger case: multi-tile grid (2 tiles -> both v7x TCs), non-128 tag count.
    run_case(4, 256, 256, 48, case_id=1)

    print("KERNEL_OK")
</pallas_src>

<mosaic_0001>
module attributes {stable_mosaic.version = 11 : i64} {
  func.func @_tagger_kernel(%arg0: i32, %arg1: memref<16x32xf32, #tpu.memory_space<vmem>>, %arg2: memref<32x16xbf16, #tpu.memory_space<vmem>>, %arg3: memref<1x16xf32, #tpu.memory_space<vmem>>, %arg4: memref<16x1xi32, #tpu.memory_space<vmem>>, %arg5: memref<16x16xf32, #tpu.memory_space<vmem>>, %arg6: memref<1x1x128xf32, #tpu.memory_space<vmem>>) attributes {dimension_semantics = [#tpu.dimension_semantics<parallel>], iteration_bounds = array<i64: 1>, scalar_prefetch = 0 : i64, scratch_operands = 0 : i64, tpu.core_type = #tpu.core_type<tc>, window_params = [{transform_indices = @transform_0, window_bounds = array<i64: 16, 32>}, {pipeline_mode = #tpu.pipeline_mode<synchronous>, transform_indices = @transform_1, window_bounds = array<i64: 32, 16>}, {pipeline_mode = #tpu.pipeline_mode<synchronous>, transform_indices = @transform_2, window_bounds = array<i64: 1, 16>}, {transform_indices = @transform_3, window_bounds = array<i64: 16, 1>}, {transform_indices = @transform_4, window_bounds = array<i64: 16, 16>}, {transform_indices = @transform_5, window_bounds = array<i64: 1, 1, 128>}]} {
    %c0 = arith.constant 0 : index
    %c0_0 = arith.constant 0 : index
    %0 = vector.load %arg1[%c0, %c0_0] : memref<16x32xf32, #tpu.memory_space<vmem>>, vector<16x32xf32>
    %1 = arith.truncf %0 : vector<16x32xf32> to vector<16x32xbf16>
    %c0_1 = arith.constant 0 : index
    %c0_2 = arith.constant 0 : index
    %2 = vector.load %arg2[%c0_1, %c0_2] : memref<32x16xbf16, #tpu.memory_space<vmem>>, vector<32x16xbf16>
    %cst = arith.constant dense<0.000000e+00> : vector<16x16xf32>
    %3 = tpu.matmul %1, %2, %cst {dimension_numbers = #tpu.dot_dimension_numbers<[1], [0], [0], [1], [0, 0, 1, 1], [], []>} : vector<16x32xbf16>, vector<32x16xbf16>, vector<16x16xf32> -> vector<16x16xf32>
    %c0_3 = arith.constant 0 : index
    %c0_4 = arith.constant 0 : index
    %4 = vector.load %arg3[%c0_3, %c0_4] : memref<1x16xf32, #tpu.memory_space<vmem>>, vector<1x16xf32>
    %5 = vector.broadcast %4 : vector<1x16xf32> to vector<16x16xf32>
    %6 = arith.addf %3, %5 : vector<16x16xf32>
    %c0_5 = arith.constant 0 : index
    %c0_6 = arith.constant 0 : index
    %7 = vector.load %arg5[%c0_5, %c0_6] : memref<16x16xf32, #tpu.memory_space<vmem>>, vector<16x16xf32>
    tpu.vector_store %arg5[%c0_5, %c0_6], %6 {strides = array<i32>} : memref<16x16xf32, #tpu.memory_space<vmem>>, vector<16x16xf32>,
    %c0_7 = arith.constant 0 : index
    %c0_8 = arith.constant 0 : index
    %8 = vector.load %arg4[%c0_7, %c0_8] : memref<16x1xi32, #tpu.memory_space<vmem>>, vector<16x1xi32>
    %9 = tpu.iota {dimensions = array<i32: 1>} : vector<16x16xi32>
    %10 = vector.broadcast %8 : vector<16x1xi32> to vector<16x16xi32>
    %11 = arith.cmpi eq, %9, %10 : vector<16x16xi32>
    %cst_9 = arith.constant 0.000000e+00 : f32
    %12 = vector.broadcast %cst_9 : f32 to vector<16x16xf32>
    %13 = arith.select %11, %6, %12 : vector<16x16xi1>, vector<16x16xf32>
    %cst_10 = arith.constant dense<0.000000e+00> : vector<16xf32>
    %14 = vector.multi_reduction <add>, %13, %cst_10 [1] : vector<16x16xf32> to vector<16xf32>
    %15 = vector.shape_cast %14 : vector<16xf32> to vector<16x1xf32>
    %cst_11 = arith.constant dense<0xFF800000> : vector<16xf32>
    %16 = vector.multi_reduction <maximumf>, %6, %cst_11 [1] : vector<16x16xf32> to vector<16xf32>
    %17 = vector.shape_cast %16 : vector<16xf32> to vector<16x1xf32>
    %18 = vector.broadcast %17 : vector<16x1xf32> to vector<16x16xf32>
    %19 = arith.subf %6, %18 : vector<16x16xf32>
    %20 = math.exp %19 : vector<16x16xf32>
    %cst_12 = arith.constant dense<0.000000e+00> : vector<16xf32>
    %21 = vector.multi_reduction <add>, %20, %cst_12 [1] : vector<16x16xf32> to vector<16xf32>
    %22 = vector.shape_cast %21 : vector<16xf32> to vector<16x1xf32>
    %23 = math.log %22 : vector<16x1xf32>
    %24 = arith.addf %17, %23 : vector<16x1xf32>
    %25 = arith.subf %24, %15 : vector<16x1xf32>
    %c0_i32 = arith.constant 0 : i32
    %26 = vector.broadcast %c0_i32 : i32 to vector<16x1xi32>
    %27 = arith.cmpi ne, %8, %26 : vector<16x1xi32>
    %28 = arith.extui %27 : vector<16x1xi1> to vector<16x1xi32>
    %29 = arith.sitofp %28 : vector<16x1xi32> to vector<16x1xf32>
    %30 = arith.mulf %25, %29 : vector<16x1xf32>
    %31 = vector.shape_cast %30 : vector<16x1xf32> to vector<1x16x1xf32>
    %cst_13 = arith.constant dense<0.000000e+00> : vector<1xf32>
    %32 = vector.multi_reduction <add>, %31, %cst_13 [1, 2] : vector<1x16x1xf32> to vector<1xf32>
    %33 = vector.shape_cast %32 : vector<1xf32> to vector<1x1x1xf32>
    %34 = vector.extract %33[0, 0, 0] : f32 from vector<1x1x1xf32>
    %35 = vector.shape_cast %29 : vector<16x1xf32> to vector<1x16x1xf32>
    %cst_14 = arith.constant dense<0.000000e+00> : vector<1xf32>
    %36 = vector.multi_reduction <add>, %35, %cst_14 [1, 2] : vector<1x16x1xf32> to vector<1xf32>
    %37 = vector.shape_cast %36 : vector<1xf32> to vector<1x1x1xf32>
    %38 = vector.extract %37[0, 0, 0] : f32 from vector<1x1x1xf32>
    %39 = tpu.iota {dimensions = array<i32: 2>} : vector<1x1x128xi32>
    %c0_i32_15 = arith.constant 0 : i32
    %40 = vector.broadcast %c0_i32_15 : i32 to vector<1x1x128xi32>
    %41 = arith.cmpi eq, %39, %40 : vector<1x1x128xi32>
    %c1_i32 = arith.constant 1 : i32
    %42 = vector.broadcast %c1_i32 : i32 to vector<1x1x128xi32>
    %43 = arith.cmpi eq, %39, %42 : vector<1x1x128xi32>
    %cst_16 = arith.constant 0.000000e+00 : f32
    %44 = vector.broadcast %38 : f32 to vector<1x1x128xf32>
    %45 = vector.broadcast %cst_16 : f32 to vector<1x1x128xf32>
    %46 = arith.select %43, %44, %45 : vector<1x1x128xi1>, vector<1x1x128xf32>
    %47 = vector.broadcast %34 : f32 to vector<1x1x128xf32>
    %48 = arith.select %41, %47, %46 : vector<1x1x128xi1>, vector<1x1x128xf32>
    %c0_17 = arith.constant 0 : index
    %c0_18 = arith.constant 0 : index
    %c0_19 = arith.constant 0 : index
    %49 = vector.load %arg6[%c0_17, %c0_18, %c0_19] : memref<1x1x128xf32, #tpu.memory_space<vmem>>, vector<1x1x128xf32>
    tpu.vector_store %arg6[%c0_17, %c0_18, %c0_19], %48 {strides = array<i32>} : memref<1x1x128xf32, #tpu.memory_space<vmem>>, vector<1x1x128xf32>,
    return
  }
  func.func @transform_0(%arg0: i32) -> (i32, i32) {
    %c0_i32 = arith.constant 0 : i32
    %c0_i32_0 = arith.constant 0 : i32
    return %arg0, %c0_i32 : i32, i32
  }
  func.func @transform_1(%arg0: i32) -> (i32, i32) {
    %c0_i32 = arith.constant 0 : i32
    %c0_i32_0 = arith.constant 0 : i32
    %c0_i32_1 = arith.constant 0 : i32
    return %c0_i32, %c0_i32_0 : i32, i32
  }
  func.func @transform_2(%arg0: i32) -> (i32, i32) {
    %c0_i32 = arith.constant 0 : i32
    %c0_i32_0 = arith.constant 0 : i32
    %c0_i32_1 = arith.constant 0 : i32
    return %c0_i32, %c0_i32_0 : i32, i32
  }
  func.func @transform_3(%arg0: i32) -> (i32, i32) {
    %c0_i32 = arith.constant 0 : i32
    %c0_i32_0 = arith.constant 0 : i32
    return %arg0, %c0_i32 : i32, i32
  }
  func.func @transform_4(%arg0: i32) -> (i32, i32) {
    %c0_i32 = arith.constant 0 : i32
    %c0_i32_0 = arith.constant 0 : i32
    return %arg0, %c0_i32 : i32, i32
  }
  func.func @transform_5(%arg0: i32) -> (i32, i32, i32) {
    %c0_i32 = arith.constant 0 : i32
    %c0_i32_0 = arith.constant 0 : i32
    %c0_i32_1 = arith.constant 0 : i32
    return %arg0, %c0_i32, %c0_i32_0 : i32, i32, i32
  }
}

</mosaic_0001>

<llo_original>
// kernel: tpu_custom_call.1
$region0: #{tpu_custom_call.1}
  #allocation0 [shape = 'u32[]', space=smem, size = 0x4, offset = 0x4, fixed_abs, tag = 'smem constant byte address 0x4 - core index']
  #allocation1 [shape = 'u32[144,128]{1,0:T(1,128)}', space=vmem, size = 0x12000, scoped, tag = 'internal scratch']
  %s0 = inlined_call_operand.vmem [shape: f32[16,32], index: 0, kind: input, shape index: {}]
  %s1 = inlined_call_operand.vmem [shape: bf16[32,16], index: 1, kind: input, shape index: {}]
  %s2 = inlined_call_operand.vmem [shape: f32[1,16], index: 2, kind: input, shape index: {}]
  %s3 = inlined_call_operand.vmem [shape: s32[16,1], index: 3, kind: input, shape index: {}]
  %s4 = inlined_call_operand.hbm [shape: f32[16,16], index: 4, kind: output, shape index: {0}]
  %s5 = inlined_call_operand.hbm [shape: f32[1,1,128], index: 5, kind: output, shape index: {1}]
  %6 = xla_tuple %s4, %s5
  %s7 = sld [smem:[#allocation0]]
  $region34: #{tpu_custom_call.1} parent=0
    _
  %s9 = ssub.s32 1, %s7
  %s10 = scalar_select 0, %s9, %s7
  $region1: #{tpu_custom_call.1} parent=0
    #allocation2 [shape = 'u8[8192]{0}', space=vmem, size = 0x2000, scoped, tag = 'output window, operand 0, single buffered']
    #allocation3 [shape = 's32[1]{0}', space=sflag, size = 0x4, scoped, tag = 'scoped memory for tpu_custom_call.1']
    #allocation4 [shape = 'u8[512]{0}', space=vmem, size = 0x400, scoped, tag = 'output window, operand 1, single buffered']
    #allocation5 [shape = 's32[1]{0}', space=sflag, size = 0x4, scoped, tag = 'scoped memory for tpu_custom_call.1']
    %11 = vsyncpa [#allocation3], 0
    %12 = vsyncpa [#allocation5], 0
    // Predicated region
    $region2: #{tpu_custom_call.1} parent=1 // pred_check
      _
    $region3: #{tpu_custom_call.1} parent=1 // pred_check_branch
      %14 = sbr.rel (0) target = $region5
    $region4: #{tpu_custom_call.1} parent=1 // pred_region
      _
    $region5: #{tpu_custom_call.1} parent=1 // pred_fallthru
      _
    // Predicated region
    $region6: #{tpu_custom_call.1} parent=1 // pred_check
      _
    $region7: #{tpu_custom_call.1} parent=1 // pred_check_branch
      %16 = sbr.rel (0) target = $region9
    $region8: #{tpu_custom_call.1} parent=1 // pred_region
      _
    $region9: #{tpu_custom_call.1} parent=1 // pred_fallthru
      _
    // Predicated region
    $region10: #{tpu_custom_call.1} parent=1 // pred_check
      _
    $region11: #{tpu_custom_call.1} parent=1 // pred_check_branch
      %18 = sbr.rel (0) target = $region13
    $region12: #{tpu_custom_call.1} parent=1 // pred_region
      _
    $region13: #{tpu_custom_call.1} parent=1 // pred_fallthru
      _
    // Predicated region
    $region14: #{tpu_custom_call.1} parent=1 // pred_check
      _
    $region15: #{tpu_custom_call.1} parent=1 // pred_check_branch
      %20 = sbr.rel (0) target = $region17
    $region16: #{tpu_custom_call.1} parent=1 // pred_region
      _
    $region17: #{tpu_custom_call.1} parent=1 // pred_fallthru
      _
    %v22 = vld [vmem:[%s0] sm:$0xff]
    %v23 = vld [vmem:[%s0 + $0x8] sm:$0xff]
    %v24 = vpack.c.bf16 %v23, %v22
    %v25 = vld [vmem:[%s1] sm:$0xf]
    %v26 = vld [vmem:[%s1 + $0x4] sm:$0xf]
    %v27 = vld [vmem:[%s1 + $0x8] sm:$0xf]
    %v28 = vld [vmem:[%s1 + $0xc] sm:$0xf]
    %v29 = vld [vmem:[%s2] sm:$0x1]
    %v31 = vlaneseq
    %v32 = vshrl.u32 %v31, 7
    %v33 = vsub.s32 0, %v32
    %v34 = vrot.slane %v29, %v33
    %v40 = vunpack.c.l.b16 %v25
    %v41 = vunpack.c.l.b16 %v26
    %v42 = vunpack.c.l.b16 %v27
    %v43 = vunpack.c.l.b16 %v28
    %v44 = vpack.c.b16 %v41, %v40
    %v45 = vpack.c.b16 %v43, %v42
    %vm48 = vcmask 261120
    %v50 = vsel %vm48, %v24, 0
    %52 = vmatprep.subr.bf16.mxu0 0
    %53 = vmatpush1.bf16.msra.mxu0 %v44
    %54 = vmatprep.subr.bf16.mxu0 0
    %55 = vmatpush1.bf16.msra.mxu0 %v45
    %56 = vmatprep.subr.bf16.mxu0 0
    %57 = vmatpush1.bf16.msra.mxu0 0
    %58 = vmatprep.subr.bf16.mxu0 0
    %59 = vmatpush1.bf16.msra.mxu0 0
    %60 = vmatprep.subr.bf16.mxu0 0
    %61 = vmatpush1.bf16.msra.mxu0 0
    %62 = vmatprep.subr.bf16.mxu0 0
    %63 = vmatpush1.bf16.msra.mxu0 0
    %64 = vmatprep.subr.bf16.mxu0 0
    %65 = vmatpush1.bf16.msra.mxu0 0
    %66 = vmatprep.subr.bf16.mxu0 0
    %67 = vmatpush1.bf16.msra.mxu0 0
    %68 = vmatprep.subr.bf16.mxu0 0
    %69 = vmatpush1.bf16.msra.mxu0 0
    %70 = vmatprep.subr.bf16.mxu0 0
    %71 = vmatpush1.bf16.msra.mxu0 0
    %72 = vmatprep.subr.bf16.mxu0 0
    %73 = vmatpush1.bf16.msra.mxu0 0
    %74 = vmatprep.subr.bf16.mxu0 0
    %75 = vmatpush1.bf16.msra.mxu0 0
    %76 = vmatprep.subr.bf16.mxu0 0
    %77 = vmatpush1.bf16.msra.mxu0 0
    %78 = vmatprep.subr.bf16.mxu0 0
    %79 = vmatpush1.bf16.msra.mxu0 0
    %80 = vmatprep.subr.bf16.mxu0 0
    %81 = vmatpush1.bf16.msra.mxu0 0
    %82 = vmatprep.subr.bf16.mxu0 0
    %83 = vmatpush1.bf16.msra.mxu0 0
    %84 = vmatprep.mubr.bf16.mxu0 0
    %85 = vmatmul.mubr.bf16.gmra.mrb[0].mxu0 %v50
    %v86 = vpop.f32.mrb[0].mxu0
    %v87 = vadd.f32 %v34, %v86
    %v88 = vpop.f32.mrb[0].mxu0
    %v89 = vpop.f32.mrb[0].mxu0
    %v90 = vadd.f32 %v34, %v89
    %v91 = vpop.f32.mrb[0].mxu0
    %92 = vdwg.mxu0
    %vm93 = vcmask 130048
    %94 = vst.msk [vmem:[#allocation2] sm:$0xff] %vm93, %v87
    %95 = vst.msk [vmem:[#allocation2 + $0x8] sm:$0xff] %vm93, %v90
    %v96 = vld [vmem:[%s3] sm:$0xff]
    %v97 = vld [vmem:[%s3 + $0x8] sm:$0xff]
    %v98 = vlaneseq
    %v99 = vand.u32 %v98, 127
    %100 = vset.pattern.permute.xlu0 0
    %101 = vperm.xlu0 %100, %v96
    %v102 = vpop.permute.xlu0 %101
    %103 = vset.pattern.permute.xlu0 0
    %104 = vperm.xlu0 %103, %v97
    %v105 = vpop.permute.xlu0 %104
    %vm106 = vcmp.eq.s32.totalorder %v99, %v102
    %vm107 = vcmp.eq.s32.totalorder %v99, %v105
    %v108 = vsel %vm106, %v87, 0.0
    %v109 = vsel %vm107, %v90, 0.0
    %v110 = vsel %vm93, %v108, 0.0
    %111 = vadd.xlane.f32.xlu0 %v110
    %v112 = vpop.xlane.xlu0 %111
    %v113 = vsel %vm93, %v109, 0.0
    %114 = vadd.xlane.f32.xlu0 %v113
    %v115 = vpop.xlane.xlu0 %114
    %v116 = vsel %vm93, %v87, -inf
    %117 = vmax.xlane.f32.xlu0 %v116
    %v118 = vpop.xlane.xlu0 %117
    %v119 = vsel %vm93, %v90, -inf
    %120 = vmax.xlane.f32.xlu0 %v119
    %v121 = vpop.xlane.xlu0 %120
    %v122 = vsub.f32 %v87, %v118
    %v123 = vsub.f32 %v90, %v121
    %v124 = vmul.f32 %v122, 1.442695
    %v125 = vpow.pop %v124
    %v126 = vmul.f32 %v123, 1.442695
    %v127 = vpow.pop %v126
    %v128 = vsel %vm93, %v125, 0.0
    %129 = vadd.xlane.f32.xlu0 %v128
    %v130 = vpop.xlane.xlu0 %129
    %v131 = vsel %vm93, %v127, 0.0
    %132 = vadd.xlane.f32.xlu0 %v131
    %v133 = vpop.xlane.xlu0 %132
    %v134 = vlog2.pop %v130
    %v135 = vmul.f32 %v134, 0.6931472
    %v136 = vlog2.pop %v133
    %v137 = vmul.f32 %v136, 0.6931472
    %v138 = vadd.f32 %v118, %v135
    %v139 = vadd.f32 %v121, %v137
    %v140 = vsub.f32 %v138, %v112
    %v141 = vsub.f32 %v139, %v115
    %vm142 = vcmp.ne.s32.totalorder %v96, 0
    %vm143 = vcmp.ne.s32.totalorder %v97, 0
    %v144 = vsel %vm142, 1, 0
    %v145 = vsel %vm143, 1, 0
    %v146 = vcvt.s32.f32 %v144
    %v147 = vcvt.s32.f32 %v145
    %v148 = vmul.f32 %v140, %v146
    %v149 = vmul.f32 %v141, %v147
    %vm150 = vcmask 7168
    %v151 = vsel %vm150, %v148, 0.0
    %v152 = vsel %vm150, %v149, 0.0
    %v153 = vadd.f32 %v151, %v152
    %154 = vadd.xlane.f32.xlu0 %v153
    %v155 = vpop.xlane.xlu0 %154
    %v156 = vrot.slane %v155, 4
    %v157 = vadd.f32 %v155, %v156
    %v158 = vrot.slane %v157, 2
    %v159 = vadd.f32 %v157, %v158
    %v160 = vrot.slane %v159, 1
    %v161 = vadd.f32 %v159, %v160
    %s162 = vtos %v161
    %v163 = vsel %vm150, %v146, 0.0
    %v164 = vsel %vm150, %v147, 0.0
    %v165 = vadd.f32 %v163, %v164
    %166 = vadd.xlane.f32.xlu0 %v165
    %v167 = vpop.xlane.xlu0 %166
    %v168 = vrot.slane %v167, 4
    %v169 = vadd.f32 %v167, %v168
    %v170 = vrot.slane %v169, 2
    %v171 = vadd.f32 %v169, %v170
    %v172 = vrot.slane %v171, 1
    %v173 = vadd.f32 %v171, %v172
    %s174 = vtos %v173
    %vm175 = vcmp.eq.s32.totalorder %v99, 0
    %vm176 = vcmp.eq.s32.totalorder %v99, 1
    %v177 = vstv %s174
    %v178 = vsel %vm176, %v177, 0.0
    %v179 = vstv %s162
    %v180 = vsel %vm175, %v179, %v178
    %181 = vst [vmem:[#allocation4] sm:$0x1] %v180
    // Predicated region
    $region18: #{tpu_custom_call.1} parent=1 // pred_check
      _
    $region19: #{tpu_custom_call.1} parent=1 // pred_check_branch
      %183 = sbr.rel (0) target = $region21
    $region20: #{tpu_custom_call.1} parent=1 // pred_region
      %s185 = ssub.s32 256, 256
      %186 = vsyncadd [#allocation3], %s185
      %s187 = sshll.u32 [#allocation2], 4
      %s188 = int_to_ptr.vmem [resolvable:$true] %s187
      %193 = dma.vmem_to_hbm [thread:$0]  %s188, 256, %s4, [#allocation3], 128, 128, 8
    $region21: #{tpu_custom_call.1} parent=1 // pred_fallthru
      _
    // Predicated region
    $region22: #{tpu_custom_call.1} parent=1 // pred_check
      _
    $region23: #{tpu_custom_call.1} parent=1 // pred_check_branch
      %195 = sbr.rel (0) target = $region25
    $region24: #{tpu_custom_call.1} parent=1 // pred_region
      %s197 = ssub.s32 16, 16
      %198 = vsyncadd [#allocation5], %s197
      %s200 = sshll.u32 [#allocation4], 4
      %s201 = int_to_ptr.vmem [resolvable:$true] %s200
      %203 = dma.vmem_to_hbm [thread:$0]  %s201, 16, %s5, [#allocation5]
    $region25: #{tpu_custom_call.1} parent=1 // pred_fallthru
      _
    // Predicated region
    $region26: #{tpu_custom_call.1} parent=1 // pred_check
      _
    $region27: #{tpu_custom_call.1} parent=1 // pred_check_branch
      %205 = sbr.rel (0) target = $region29
    $region28: #{tpu_custom_call.1} parent=1 // pred_region
      %206 = dma.done [#allocation3], 256
    $region29: #{tpu_custom_call.1} parent=1 // pred_fallthru
      _
    // Predicated region
    $region30: #{tpu_custom_call.1} parent=1 // pred_check
      _
    $region31: #{tpu_custom_call.1} parent=1 // pred_check_branch
      %208 = sbr.rel (0) target = $region33
    $region32: #{tpu_custom_call.1} parent=1 // pred_region
      %209 = dma.done [#allocation5], 16
    $region33: #{tpu_custom_call.1} parent=1 // pred_fallthru
      _
    %210 = vsyncpa [#allocation3], 1
    %211 = vsyncpa [#allocation5], 1

</llo_original>
